<compile_context>
chip_gen: v6e
topology: v6e:2x2x1
jax: 0.10.0
libtpu: 0.0.40
codegen_flags: <defaults>
</compile_context>

<pallas_src>
import math

import jax
import jax.numpy as jnp
from jax.experimental import pallas as pl
from jax.experimental.pallas import tpu as pltpu


# ----------------------------------------------------------------------------
# Constant buffer (equivalent of register_buffer('pe', ...))
# ----------------------------------------------------------------------------
def make_positional_encoding(d_model, max_seq_length, dtype=jnp.float32):
    position = jnp.arange(max_seq_length, dtype=jnp.float32)[:, None]        # (L, 1)
    div_term = jnp.exp(
        jnp.arange(0, d_model, 2, dtype=jnp.float32) * (-math.log(10000.0) / d_model)
    )                                                                         # (D/2,)
    angles = position * div_term                                              # (L, D/2)
    pe = jnp.zeros((max_seq_length, d_model), jnp.float32)
    pe = pe.at[:, 0::2].set(jnp.sin(angles))
    pe = pe.at[:, 1::2].set(jnp.cos(angles))
    return pe.astype(dtype)                                                   # (L, D)


# ----------------------------------------------------------------------------
# Pallas kernel: out = x + pe  (pe broadcast over the batch dim)
#   x_ref  : (B, tR, Tl)   tile of the flattened (seq*d_model) slab
#   pe_ref : (1, tR, Tl)   matching tile of the positional table
# ----------------------------------------------------------------------------
def _add_pe_kernel(x_ref, pe_ref, o_ref):
    o_ref[...] = (x_ref[...] + pe_ref[...]).astype(o_ref.dtype)


def _largest_lane_tile(g, lane_cap):
    """Largest multiple of 128 dividing g, capped at lane_cap (None if g % 128)."""
    if g % 128 != 0:
        return None
    k = max(1, min(g, lane_cap) // 128)
    while k > 1 and g % (128 * k) != 0:
        k -= 1
    return 128 * k


def positional_encoding_forward(x, pe, *, target_step_bytes=8 * 1024 * 1024,
                                lane_cap=1024):
    """x: (B, S, D);  pe: (max_seq_length, D) with max_seq_length >= S."""
    B, S, D = x.shape
    max_len, d_pe = pe.shape
    assert d_pe == D and max_len >= S, "pe table too small for input"

    # Stream pe at the activation dtype (no-op when already matching).
    pe = pe.astype(x.dtype)
    itemsize = jnp.dtype(x.dtype).itemsize

    L = S * D                      # flattened (seq*d_model) elements per batch row
    L_full = max_len * D

    # Lane tile: largest multiple of 128 dividing BOTH L and L_full
    # (their gcd is D * gcd(S, max_len)); else fall back to the natural layout
    # where the last block dim equals the full array dim (always legal).
    g = D * math.gcd(S, max_len)
    Tl = _largest_lane_tile(g, lane_cap)
    if Tl is None:
        Tl = D
    R = L // Tl                    # rows of the flattened slab actually needed

    # Row (sublane) tile sized so each grid step moves ~target_step_bytes of
    # HBM traffic: (x read + out write) * B + pe read = (2B+1)*tR*Tl*itemsize.
    rows_budget = max(1, target_step_bytes // ((2 * B + 1) * Tl * itemsize))

    if R < 8:
        # Tiny input: single full-extent block. pe must be sliced so its block
        # dims legally match (< 8*Tl elements copied -- negligible).
        tR = R
        pe_view = jax.lax.slice(pe, (0, 0), (S, D)).reshape(1, R, Tl)
    else:
        tR = min((R // 8) * 8, max(8, (rows_budget // 8) * 8))
        # Full table, reshaped (free for a contiguous row-major array): its
        # first R rows are exactly pe[:S] flattened; grid indexes only rows < R.
        pe_view = pe.reshape(1, L_full // Tl, Tl)

    x3 = x.reshape(B, R, Tl)       # free for contiguous row-major x
    grid = (pl.cdiv(R, tR),)       # ragged last block handled by Pallas

    out3 = pl.pallas_call(
        _add_pe_kernel,
        out_shape=jax.ShapeDtypeStruct((B, R, Tl), x.dtype),
        grid=grid,
        in_specs=[
            pl.BlockSpec((B, tR, Tl), lambda i: (0, i, 0)),   # activations tile
            pl.BlockSpec((1, tR, Tl), lambda i: (0, i, 0)),   # pe tile (bcast over B)
        ],
        out_specs=pl.BlockSpec((B, tR, Tl), lambda i: (0, i, 0)),
        compiler_params=pltpu.CompilerParams(
            dimension_semantics=("parallel",),
            vmem_limit_bytes=32 * 1024 * 1024,
        ),
    )(x3, pe_view)
    return out3.reshape(B, S, D)


# ----------------------------------------------------------------------------
# Pure-JAX reference
# ----------------------------------------------------------------------------
def reference_positional_encoding(x, pe):
    S = x.shape[1]
    return x + pe[None, :S, :]


if __name__ == "__main__":
    key = jax.random.PRNGKey(0)

    # Primary small-shape check (matches the module's typical forward).
    B, S, d_model, max_seq_length = 2, 8, 32, 16
    x = jax.random.normal(key, (B, S, d_model), jnp.float32)
    pe = make_positional_encoding(d_model, max_seq_length, dtype=x.dtype)
    out = jax.block_until_ready(positional_encoding_forward(x, pe))
    ref = reference_positional_encoding(x, pe)
    assert out.shape == (B, S, d_model)
    assert jnp.allclose(out, ref, atol=1e-6, rtol=1e-6), "mismatch vs reference"

    # Exercise the multi-step pipelined path (R >= 8, evenly divided grid).
    k1, k2 = jax.random.split(key)
    x2 = jax.random.normal(k1, (2, 128, 128), jnp.float32)
    pe2 = make_positional_encoding(128, 256, dtype=x2.dtype)
    o2 = jax.block_until_ready(
        positional_encoding_forward(x2, pe2, target_step_bytes=64 * 1024))
    assert jnp.allclose(o2, reference_positional_encoding(x2, pe2), atol=1e-6, rtol=1e-6)

    # Exercise the ragged-last-block path (R not divisible by tR).
    x3 = jax.random.normal(k2, (3, 96, 128), jnp.float32)
    pe3 = make_positional_encoding(128, 256, dtype=x3.dtype)
    o3 = jax.block_until_ready(
        positional_encoding_forward(x3, pe3, target_step_bytes=64 * 1024))
    assert jnp.allclose(o3, reference_positional_encoding(x3, pe3), atol=1e-6, rtol=1e-6)

    print("KERNEL_OK")
</pallas_src>

<mosaic_0001>
module attributes {stable_mosaic.version = 11 : i64} {
  func.func @_add_pe_kernel(%arg0: i32, %arg1: memref<2x1x256xf32, #tpu.memory_space<vmem>>, %arg2: memref<1x1x256xf32, #tpu.memory_space<vmem>>, %arg3: memref<2x1x256xf32, #tpu.memory_space<vmem>>) attributes {dimension_semantics = [#tpu.dimension_semantics<parallel>], iteration_bounds = array<i64: 1>, scalar_prefetch = 0 : i64, scratch_operands = 0 : i64, tpu.core_type = #tpu.core_type<tc>, window_params = [{transform_indices = @transform_0, window_bounds = array<i64: 2, 1, 256>}, {transform_indices = @transform_1, window_bounds = array<i64: 1, 1, 256>}, {transform_indices = @transform_2, window_bounds = array<i64: 2, 1, 256>}]} {
    %c0 = arith.constant 0 : index
    %c0_0 = arith.constant 0 : index
    %c0_1 = arith.constant 0 : index
    %0 = vector.load %arg1[%c0, %c0_0, %c0_1] : memref<2x1x256xf32, #tpu.memory_space<vmem>>, vector<2x1x256xf32>
    %c0_2 = arith.constant 0 : index
    %c0_3 = arith.constant 0 : index
    %c0_4 = arith.constant 0 : index
    %1 = vector.load %arg2[%c0_2, %c0_3, %c0_4] : memref<1x1x256xf32, #tpu.memory_space<vmem>>, vector<1x1x256xf32>
    %2 = vector.broadcast %1 : vector<1x1x256xf32> to vector<2x1x256xf32>
    %3 = arith.addf %0, %2 : vector<2x1x256xf32>
    %c0_5 = arith.constant 0 : index
    %c0_6 = arith.constant 0 : index
    %c0_7 = arith.constant 0 : index
    %4 = vector.load %arg3[%c0_5, %c0_6, %c0_7] : memref<2x1x256xf32, #tpu.memory_space<vmem>>, vector<2x1x256xf32>
    tpu.vector_store %arg3[%c0_5, %c0_6, %c0_7], %3 {strides = array<i32>} : memref<2x1x256xf32, #tpu.memory_space<vmem>>, vector<2x1x256xf32>,
    return
  }
  func.func @transform_0(%arg0: i32) -> (i32, i32, i32) {
    %c0_i32 = arith.constant 0 : i32
    %c0_i32_0 = arith.constant 0 : i32
    %c0_i32_1 = arith.constant 0 : i32
    return %c0_i32, %arg0, %c0_i32_0 : i32, i32, i32
  }
  func.func @transform_1(%arg0: i32) -> (i32, i32, i32) {
    %c0_i32 = arith.constant 0 : i32
    %c0_i32_0 = arith.constant 0 : i32
    %c0_i32_1 = arith.constant 0 : i32
    return %c0_i32, %arg0, %c0_i32_0 : i32, i32, i32
  }
  func.func @transform_2(%arg0: i32) -> (i32, i32, i32) {
    %c0_i32 = arith.constant 0 : i32
    %c0_i32_0 = arith.constant 0 : i32
    %c0_i32_1 = arith.constant 0 : i32
    return %c0_i32, %arg0, %c0_i32_0 : i32, i32, i32
  }
}

</mosaic_0001>

<llo_original>
// kernel: tpu_custom_call.1
$region0: #{tpu_custom_call.1}
  #allocation0 [shape = 'u32[]', space=smem, size = 0x4, offset = 0x4, fixed_abs, tag = 'smem constant byte address 0x4 - core index']
  #allocation1 [shape = 'u32[144,128]{1,0:T(1,128)}', space=vmem, size = 0x12000, scoped, tag = 'internal scratch']
  %s0 = inlined_call_operand.hbm [shape: f32[2,1,256], index: 0, kind: input, shape index: {}]
  %s1 = inlined_call_operand.hbm [shape: f32[1,1,256], index: 1, kind: input, shape index: {}]
  %s2 = inlined_call_operand.hbm [shape: f32[2,1,256], index: 2, kind: output, shape index: {}]
  %s3 = sld [smem:[#allocation0]]
  $region26: #{tpu_custom_call.1} parent=0
    _
  %s5 = ssub.s32 1, %s3
  %s6 = scalar_select 0, %s5, %s3
  $region1: #{tpu_custom_call.1} parent=0
    #allocation2 [shape = 'u8[2048]{0}', space=vmem, size = 0x800, scoped, tag = 'input window, operand 0, single buffered']
    #allocation3 [shape = 's32[1]{0}', space=sflag, size = 0x4, scoped, tag = 'scoped memory for tpu_custom_call.1']
    #allocation4 [shape = 's32[1]{0}', space=sflag, size = 0x4, scoped, tag = 'scoped memory for tpu_custom_call.1']
    #allocation5 [shape = 'u8[1024]{0}', space=vmem, size = 0x400, scoped, tag = 'input window, operand 1, single buffered']
    #allocation6 [shape = 's32[1]{0}', space=sflag, size = 0x4, scoped, tag = 'scoped memory for tpu_custom_call.1']
    #allocation7 [shape = 'u8[2048]{0}', space=vmem, size = 0x800, scoped, tag = 'output window, operand 0, single buffered']
    %7 = vsyncpa [#allocation3], 0
    %8 = vsyncpa [#allocation6], 0
    %9 = vsyncpa [#allocation4], 0
    // Predicated region
    $region2: #{tpu_custom_call.1} parent=1 // pred_check
      _
    $region3: #{tpu_custom_call.1} parent=1 // pred_check_branch
      %11 = sbr.rel (0) target = $region5
    $region4: #{tpu_custom_call.1} parent=1 // pred_region
      %s13 = ssub.s32 64, 64
      %14 = vsyncadd [#allocation3], %s13
      %s15 = sshll.u32 [#allocation2], 4
      %s16 = int_to_ptr.vmem [resolvable:$true] %s15
      %21 = dma.hbm_to_vmem [thread:$0]  %s0, 64, %s16, [#allocation3], 32, 32, 2
    $region5: #{tpu_custom_call.1} parent=1 // pred_fallthru
      _
    // Predicated region
    $region6: #{tpu_custom_call.1} parent=1 // pred_check
      _
    $region7: #{tpu_custom_call.1} parent=1 // pred_check_branch
      %23 = sbr.rel (0) target = $region9
    $region8: #{tpu_custom_call.1} parent=1 // pred_region
      %s25 = ssub.s32 32, 32
      %26 = vsyncadd [#allocation6], %s25
      %s28 = sshll.u32 [#allocation5], 4
      %s29 = int_to_ptr.vmem [resolvable:$true] %s28
      %31 = dma.hbm_to_vmem [thread:$0]  %s1, 32, %s29, [#allocation6]
    $region9: #{tpu_custom_call.1} parent=1 // pred_fallthru
      _
    // Predicated region
    $region10: #{tpu_custom_call.1} parent=1 // pred_check
      _
    $region11: #{tpu_custom_call.1} parent=1 // pred_check_branch
      %33 = sbr.rel (0) target = $region13
    $region12: #{tpu_custom_call.1} parent=1 // pred_region
      %34 = dma.done [#allocation3], 64
    $region13: #{tpu_custom_call.1} parent=1 // pred_fallthru
      _
    // Predicated region
    $region14: #{tpu_custom_call.1} parent=1 // pred_check
      _
    $region15: #{tpu_custom_call.1} parent=1 // pred_check_branch
      %36 = sbr.rel (0) target = $region17
    $region16: #{tpu_custom_call.1} parent=1 // pred_region
      %37 = dma.done [#allocation6], 32
    $region17: #{tpu_custom_call.1} parent=1 // pred_fallthru
      _
    %v38 = vld [vmem:[#allocation2] sm:$0x3]
    %v39 = vld [vmem:[#allocation2 + $0x2] sm:$0x3]
    %v40 = vld [vmem:[#allocation5] sm:$0x3]
    %v41 = vadd.f32 %v38, %v40
    %v42 = vadd.f32 %v39, %v40
    %v43 = vlaneseq
    %vm44 = vcmp.ge.s32.totalorder %v43, 0
    %vm45 = vcmp.lt.s32.totalorder %v43, 256
    %vm46 = vmand %vm44, %vm45
    %47 = vst.msk [vmem:[#allocation7] sm:$0x3] %vm46, %v41
    %48 = vst.msk [vmem:[#allocation7 + $0x2] sm:$0x3] %vm46, %v42
    // Predicated region
    $region18: #{tpu_custom_call.1} parent=1 // pred_check
      _
    $region19: #{tpu_custom_call.1} parent=1 // pred_check_branch
      %50 = sbr.rel (0) target = $region21
    $region20: #{tpu_custom_call.1} parent=1 // pred_region
      %s52 = ssub.s32 64, 64
      %53 = vsyncadd [#allocation4], %s52
      %s54 = sshll.u32 [#allocation7], 4
      %s55 = int_to_ptr.vmem [resolvable:$true] %s54
      %60 = dma.vmem_to_hbm [thread:$0]  %s55, 64, %s2, [#allocation4], 32, 32, 2
    $region21: #{tpu_custom_call.1} parent=1 // pred_fallthru
      _
    // Predicated region
    $region22: #{tpu_custom_call.1} parent=1 // pred_check
      _
    $region23: #{tpu_custom_call.1} parent=1 // pred_check_branch
      %62 = sbr.rel (0) target = $region25
    $region24: #{tpu_custom_call.1} parent=1 // pred_region
      %63 = dma.done [#allocation4], 64
    $region25: #{tpu_custom_call.1} parent=1 // pred_fallthru
      _
    %64 = vsyncpa [#allocation3], 1
    %65 = vsyncpa [#allocation6], 1
    %66 = vsyncpa [#allocation4], 1

</llo_original>
